<compile_context>
chip_gen: v7x
topology: tpu7x:2x2x1
jax: 0.10.0
libtpu: 0.0.40
codegen_flags: <defaults>
</compile_context>

<pallas_src>
import jax
import jax.numpy as jnp
from jax import lax
from jax.experimental import pallas as pl
from jax.experimental.pallas import tpu as pltpu

CONTEXT_SIZE = 2
EMBEDDING_DIM = 10
HIDDEN = 128
VOCAB = 97            # small synthetic vocabulary
LANE = 128
VOCAB_PAD = ((VOCAB + LANE - 1) // LANE) * LANE   # 128
TILE_B = 128          # batch tile; keeps grid >= 2 at B=256 (v7x megacore)
NEG_BIG = -1e30       # finite sentinel for padded vocab lanes


def ngram_kernel(idx_ref, m0_ref, m1_ref, b1_ref, w2_ref, b2_ref, out_ref):
    # idx_ref : (TILE_B, CONTEXT_SIZE) int32 token ids (VMEM)
    # m0_ref  : (VOCAB_PAD, HIDDEN)  folded emb @ w1[:E]    (resident)
    # m1_ref  : (VOCAB_PAD, HIDDEN)  folded emb @ w1[E:2E]  (resident)
    # b1_ref  : (1, HIDDEN)
    # w2_ref  : (HIDDEN, VOCAB_PAD)  (padded cols are zero)
    # b2_ref  : (1, VOCAB_PAD)       (padded cols are -1e30 -> softmax mask)
    # out_ref : (TILE_B, VOCAB_PAD)  log-probs
    tile_b = idx_ref.shape[0]
    v_pad = m0_ref.shape[0]

    tok = idx_ref[...]                                        # (tile_b, 2)

    # One-hot embedding gather on the MXU (replaces scalar gather loop).
    vocab_iota = lax.broadcasted_iota(jnp.int32, (tile_b, v_pad), 1)
    oh0 = (vocab_iota == tok[:, 0:1]).astype(jnp.float32)     # (tile_b, v_pad)
    oh1 = (vocab_iota == tok[:, 1:2]).astype(jnp.float32)

    # linear1 (embedding already folded in) + ReLU
    h = (jnp.dot(oh0, m0_ref[...], preferred_element_type=jnp.float32)
         + jnp.dot(oh1, m1_ref[...], preferred_element_type=jnp.float32)
         + b1_ref[...])
    h = jnp.maximum(h, 0.0)

    # linear2 over the lane-padded vocab; padded lanes get -1e30 from the bias.
    z = jnp.dot(h, w2_ref[...], preferred_element_type=jnp.float32) + b2_ref[...]

    # numerically stable log_softmax along dim=1
    m = jnp.max(z, axis=1, keepdims=True)
    lse = m + jnp.log(jnp.sum(jnp.exp(z - m), axis=1, keepdims=True))
    out_ref[...] = z - lse


def ngram_forward_batch(idx, emb, w1, b1, w2, b2, *, tile_b=TILE_B):
    """Batched forward: idx (B, CONTEXT_SIZE) int32 -> (B, VOCAB) f32 log-probs."""
    B = idx.shape[0]
    V, E = emb.shape
    hidden = w1.shape[1]
    v_pad = ((V + LANE - 1) // LANE) * LANE
    b_pad = ((B + tile_b - 1) // tile_b) * tile_b

    # Pad the batch (extra rows use token 0, sliced off below).
    idx_pad = jnp.zeros((b_pad, CONTEXT_SIZE), jnp.int32).at[:B].set(
        idx.astype(jnp.int32))

    # Fold Embedding into Linear1: M_c = emb @ w1[c*E:(c+1)*E, :] ; pad rows to v_pad.
    m_mats = []
    for c in range(CONTEXT_SIZE):
        m_c = emb.astype(jnp.float32) @ w1[c * E:(c + 1) * E, :]   # (V, hidden)
        m_mats.append(jnp.zeros((v_pad, hidden), jnp.float32).at[:V].set(m_c))
    m0, m1 = m_mats

    # Lane-pad the output projection; bake the softmax mask into the bias.
    w2p = jnp.zeros((hidden, v_pad), jnp.float32).at[:, :V].set(w2)
    b2p = jnp.full((1, v_pad), NEG_BIG, jnp.float32).at[:, :V].set(b2)

    out = pl.pallas_call(
        ngram_kernel,
        out_shape=jax.ShapeDtypeStruct((b_pad, v_pad), jnp.float32),
        grid_spec=pltpu.PrefetchScalarGridSpec(
            num_scalar_prefetch=0,
            grid=(b_pad // tile_b,),
            in_specs=[
                # token ids: tiled over the batch (last dim == full array dim)
                pl.BlockSpec((tile_b, CONTEXT_SIZE), lambda g: (g, 0)),
                # weights: constant index_map -> resident in VMEM across the grid
                pl.BlockSpec((v_pad, hidden), lambda g: (0, 0)),
                pl.BlockSpec((v_pad, hidden), lambda g: (0, 0)),
                pl.BlockSpec((1, hidden), lambda g: (0, 0)),
                pl.BlockSpec((hidden, v_pad), lambda g: (0, 0)),
                pl.BlockSpec((1, v_pad), lambda g: (0, 0)),
            ],
            out_specs=pl.BlockSpec((tile_b, v_pad), lambda g: (g, 0)),
        ),
        compiler_params=pltpu.CompilerParams(
            # Independent batch tiles: split across TensorCores on v7x.
            dimension_semantics=("parallel",)),
    )(idx_pad, m0, m1, b1, w2p, b2p)

    return out[:B, :V]


def ngram_forward(idx, emb, w1, b1, w2, b2):
    """Module semantics: idx (CONTEXT_SIZE,) -> (1, VOCAB) log-probs."""
    return ngram_forward_batch(idx.reshape(1, CONTEXT_SIZE), emb, w1, b1, w2, b2)


def ref_forward_batch(idx, emb, w1, b1, w2, b2):
    x = emb[idx].reshape(idx.shape[0], -1)
    h = jnp.maximum(x @ w1 + b1, 0.0)
    z = h @ w2 + b2
    return jax.nn.log_softmax(z, axis=1)


if __name__ == "__main__":
    key = jax.random.PRNGKey(0)
    k_emb, k_w1, k_b1, k_w2, k_b2, k_idx = jax.random.split(key, 6)

    in1 = CONTEXT_SIZE * EMBEDDING_DIM  # 20

    # Deterministic synthetic parameters (PyTorch-like init scales).
    emb = jax.random.normal(k_emb, (VOCAB, EMBEDDING_DIM), dtype=jnp.float32)
    w1 = jax.random.uniform(k_w1, (in1, HIDDEN), jnp.float32,
                            -1.0 / jnp.sqrt(in1), 1.0 / jnp.sqrt(in1))
    b1 = jax.random.uniform(k_b1, (1, HIDDEN), jnp.float32,
                            -1.0 / jnp.sqrt(in1), 1.0 / jnp.sqrt(in1))
    w2 = jax.random.uniform(k_w2, (HIDDEN, VOCAB), jnp.float32,
                            -1.0 / jnp.sqrt(HIDDEN), 1.0 / jnp.sqrt(HIDDEN))
    b2 = jax.random.uniform(k_b2, (1, VOCAB), jnp.float32,
                            -1.0 / jnp.sqrt(HIDDEN), 1.0 / jnp.sqrt(HIDDEN))

    # Batched contexts (amortizes weight DMA, fills the MXU M dimension).
    B = 256
    idx_batch = jax.random.randint(k_idx, (B, CONTEXT_SIZE), 0, VOCAB,
                                   dtype=jnp.int32)
    log_probs_b = ngram_forward_batch(idx_batch, emb, w1, b1, w2, b2)
    jax.block_until_ready(log_probs_b)

    expected_b = ref_forward_batch(idx_batch, emb, w1, b1, w2, b2)
    assert log_probs_b.shape == (B, VOCAB)
    assert jnp.allclose(log_probs_b, expected_b, atol=1e-4, rtol=1e-4), (
        "batched mismatch vs pure-JAX reference")

    # Module-semantics path: one context window -> (1, VOCAB) log-probs.
    idx_single = jnp.array([3, 41], dtype=jnp.int32)
    log_probs_1 = ngram_forward(idx_single, emb, w1, b1, w2, b2)
    jax.block_until_ready(log_probs_1)
    expected_1 = ref_forward_batch(idx_single[None, :], emb, w1, b1, w2, b2)
    assert log_probs_1.shape == (1, VOCAB)
    assert jnp.allclose(log_probs_1, expected_1, atol=1e-4, rtol=1e-4), (
        "single-context mismatch vs pure-JAX reference")

    print("KERNEL_OK")
</pallas_src>

<mosaic_0001>
module attributes {stable_mosaic.version = 11 : i64} {
  func.func @ngram_kernel(%arg0: i32, %arg1: memref<128x2xi32, #tpu.memory_space<vmem>>, %arg2: memref<128x128xf32, #tpu.memory_space<vmem>>, %arg3: memref<128x128xf32, #tpu.memory_space<vmem>>, %arg4: memref<1x128xf32, #tpu.memory_space<vmem>>, %arg5: memref<128x128xf32, #tpu.memory_space<vmem>>, %arg6: memref<1x128xf32, #tpu.memory_space<vmem>>, %arg7: memref<128x128xf32, #tpu.memory_space<vmem>>) attributes {dimension_semantics = [#tpu.dimension_semantics<parallel>], iteration_bounds = array<i64: 2>, scalar_prefetch = 0 : i64, scratch_operands = 0 : i64, tpu.core_type = #tpu.core_type<tc>, window_params = [{transform_indices = @transform_0, window_bounds = array<i64: 128, 2>}, {pipeline_mode = #tpu.pipeline_mode<synchronous>, transform_indices = @transform_1, window_bounds = array<i64: 128, 128>}, {pipeline_mode = #tpu.pipeline_mode<synchronous>, transform_indices = @transform_2, window_bounds = array<i64: 128, 128>}, {pipeline_mode = #tpu.pipeline_mode<synchronous>, transform_indices = @transform_3, window_bounds = array<i64: 1, 128>}, {pipeline_mode = #tpu.pipeline_mode<synchronous>, transform_indices = @transform_4, window_bounds = array<i64: 128, 128>}, {pipeline_mode = #tpu.pipeline_mode<synchronous>, transform_indices = @transform_5, window_bounds = array<i64: 1, 128>}, {transform_indices = @transform_6, window_bounds = array<i64: 128, 128>}]} {
    %c0 = arith.constant 0 : index
    %c0_0 = arith.constant 0 : index
    %0 = vector.load %arg1[%c0, %c0_0] : memref<128x2xi32, #tpu.memory_space<vmem>>, vector<128x2xi32>
    %1 = tpu.iota {dimensions = array<i32: 1>} : vector<128x128xi32>
    %2 = vector.extract_strided_slice %0 {offsets = [0, 0], sizes = [128, 1], strides = [1, 1]} : vector<128x2xi32> to vector<128x1xi32>
    %3 = vector.broadcast %2 : vector<128x1xi32> to vector<128x128xi32>
    %4 = arith.cmpi eq, %1, %3 : vector<128x128xi32>
    %5 = arith.extui %4 : vector<128x128xi1> to vector<128x128xi32>
    %6 = arith.sitofp %5 : vector<128x128xi32> to vector<128x128xf32>
    %7 = vector.extract_strided_slice %0 {offsets = [0, 1], sizes = [128, 1], strides = [1, 1]} : vector<128x2xi32> to vector<128x1xi32>
    %8 = vector.broadcast %7 : vector<128x1xi32> to vector<128x128xi32>
    %9 = arith.cmpi eq, %1, %8 : vector<128x128xi32>
    %10 = arith.extui %9 : vector<128x128xi1> to vector<128x128xi32>
    %11 = arith.sitofp %10 : vector<128x128xi32> to vector<128x128xf32>
    %c0_1 = arith.constant 0 : index
    %c0_2 = arith.constant 0 : index
    %12 = vector.load %arg2[%c0_1, %c0_2] : memref<128x128xf32, #tpu.memory_space<vmem>>, vector<128x128xf32>
    %cst = arith.constant dense<0.000000e+00> : vector<128x128xf32>
    %13 = tpu.matmul %6, %12, %cst {dimension_numbers = #tpu.dot_dimension_numbers<[1], [0], [0], [1], [0, 0, 1, 1], [], []>} : vector<128x128xf32>, vector<128x128xf32>, vector<128x128xf32> -> vector<128x128xf32>
    %c0_3 = arith.constant 0 : index
    %c0_4 = arith.constant 0 : index
    %14 = vector.load %arg3[%c0_3, %c0_4] : memref<128x128xf32, #tpu.memory_space<vmem>>, vector<128x128xf32>
    %cst_5 = arith.constant dense<0.000000e+00> : vector<128x128xf32>
    %15 = tpu.matmul %11, %14, %cst_5 {dimension_numbers = #tpu.dot_dimension_numbers<[1], [0], [0], [1], [0, 0, 1, 1], [], []>} : vector<128x128xf32>, vector<128x128xf32>, vector<128x128xf32> -> vector<128x128xf32>
    %16 = arith.addf %13, %15 : vector<128x128xf32>
    %c0_6 = arith.constant 0 : index
    %c0_7 = arith.constant 0 : index
    %17 = vector.load %arg4[%c0_6, %c0_7] : memref<1x128xf32, #tpu.memory_space<vmem>>, vector<1x128xf32>
    %18 = vector.broadcast %17 : vector<1x128xf32> to vector<128x128xf32>
    %19 = arith.addf %16, %18 : vector<128x128xf32>
    %cst_8 = arith.constant 0.000000e+00 : f32
    %20 = vector.broadcast %cst_8 : f32 to vector<128x128xf32>
    %21 = arith.maximumf %19, %20 : vector<128x128xf32>
    %c0_9 = arith.constant 0 : index
    %c0_10 = arith.constant 0 : index
    %22 = vector.load %arg5[%c0_9, %c0_10] : memref<128x128xf32, #tpu.memory_space<vmem>>, vector<128x128xf32>
    %cst_11 = arith.constant dense<0.000000e+00> : vector<128x128xf32>
    %23 = tpu.matmul %21, %22, %cst_11 {dimension_numbers = #tpu.dot_dimension_numbers<[1], [0], [0], [1], [0, 0, 1, 1], [], []>} : vector<128x128xf32>, vector<128x128xf32>, vector<128x128xf32> -> vector<128x128xf32>
    %c0_12 = arith.constant 0 : index
    %c0_13 = arith.constant 0 : index
    %24 = vector.load %arg6[%c0_12, %c0_13] : memref<1x128xf32, #tpu.memory_space<vmem>>, vector<1x128xf32>
    %25 = vector.broadcast %24 : vector<1x128xf32> to vector<128x128xf32>
    %26 = arith.addf %23, %25 : vector<128x128xf32>
    %cst_14 = arith.constant dense<0xFF800000> : vector<128xf32>
    %27 = vector.multi_reduction <maximumf>, %26, %cst_14 [1] : vector<128x128xf32> to vector<128xf32>
    %28 = vector.shape_cast %27 : vector<128xf32> to vector<128x1xf32>
    %29 = vector.broadcast %28 : vector<128x1xf32> to vector<128x128xf32>
    %30 = arith.subf %26, %29 : vector<128x128xf32>
    %31 = math.exp %30 : vector<128x128xf32>
    %cst_15 = arith.constant dense<0.000000e+00> : vector<128xf32>
    %32 = vector.multi_reduction <add>, %31, %cst_15 [1] : vector<128x128xf32> to vector<128xf32>
    %33 = vector.shape_cast %32 : vector<128xf32> to vector<128x1xf32>
    %34 = math.log %33 : vector<128x1xf32>
    %35 = arith.addf %28, %34 : vector<128x1xf32>
    %36 = vector.broadcast %35 : vector<128x1xf32> to vector<128x128xf32>
    %37 = arith.subf %26, %36 : vector<128x128xf32>
    %c0_16 = arith.constant 0 : index
    %c0_17 = arith.constant 0 : index
    %38 = vector.load %arg7[%c0_16, %c0_17] : memref<128x128xf32, #tpu.memory_space<vmem>>, vector<128x128xf32>
    tpu.vector_store %arg7[%c0_16, %c0_17], %37 {strides = array<i32>} : memref<128x128xf32, #tpu.memory_space<vmem>>, vector<128x128xf32>,
    return
  }
  func.func @transform_0(%arg0: i32) -> (i32, i32) {
    %c0_i32 = arith.constant 0 : i32
    %c0_i32_0 = arith.constant 0 : i32
    return %arg0, %c0_i32 : i32, i32
  }
  func.func @transform_1(%arg0: i32) -> (i32, i32) {
    %c0_i32 = arith.constant 0 : i32
    %c0_i32_0 = arith.constant 0 : i32
    %c0_i32_1 = arith.constant 0 : i32
    return %c0_i32, %c0_i32_0 : i32, i32
  }
  func.func @transform_2(%arg0: i32) -> (i32, i32) {
    %c0_i32 = arith.constant 0 : i32
    %c0_i32_0 = arith.constant 0 : i32
    %c0_i32_1 = arith.constant 0 : i32
    return %c0_i32, %c0_i32_0 : i32, i32
  }
  func.func @transform_3(%arg0: i32) -> (i32, i32) {
    %c0_i32 = arith.constant 0 : i32
    %c0_i32_0 = arith.constant 0 : i32
    %c0_i32_1 = arith.constant 0 : i32
    return %c0_i32, %c0_i32_0 : i32, i32
  }
  func.func @transform_4(%arg0: i32) -> (i32, i32) {
    %c0_i32 = arith.constant 0 : i32
    %c0_i32_0 = arith.constant 0 : i32
    %c0_i32_1 = arith.constant 0 : i32
    return %c0_i32, %c0_i32_0 : i32, i32
  }
  func.func @transform_5(%arg0: i32) -> (i32, i32) {
    %c0_i32 = arith.constant 0 : i32
    %c0_i32_0 = arith.constant 0 : i32
    %c0_i32_1 = arith.constant 0 : i32
    return %c0_i32, %c0_i32_0 : i32, i32
  }
  func.func @transform_6(%arg0: i32) -> (i32, i32) {
    %c0_i32 = arith.constant 0 : i32
    %c0_i32_0 = arith.constant 0 : i32
    return %arg0, %c0_i32 : i32, i32
  }
}

</mosaic_0001>

<llo_original>
// kernel: tpu_custom_call.1
$region0: #{tpu_custom_call.1}
  #allocation0 [shape = 'u32[]', space=smem, size = 0x4, offset = 0x4, fixed_abs, tag = 'smem constant byte address 0x4 - core index']
  #allocation1 [shape = 'u32[144,128]{1,0:T(1,128)}', space=vmem, size = 0x12000, scoped, tag = 'internal scratch']
  %s0 = inlined_call_operand.vmem [shape: s32[256,2], index: 0, kind: input, shape index: {}]
  %s1 = inlined_call_operand.vmem [shape: f32[128,128], index: 1, kind: input, shape index: {}]
  %s2 = inlined_call_operand.vmem [shape: f32[128,128], index: 2, kind: input, shape index: {}]
  %s3 = inlined_call_operand.vmem [shape: f32[1,128], index: 3, kind: input, shape index: {}]
  %s4 = inlined_call_operand.hbm [shape: f32[128,128], index: 4, kind: input, shape index: {}]
  %s5 = inlined_call_operand.vmem [shape: f32[1,128], index: 5, kind: input, shape index: {}]
  %s6 = inlined_call_operand.hbm [shape: f32[256,128], index: 6, kind: output, shape index: {}]
  %s7 = sld [smem:[#allocation0]]
  $region61: #{tpu_custom_call.1} parent=0
    _
  %s9 = ssub.s32 1, %s7
  %s10 = scalar_select 0, %s9, %s7
  $region1: #{tpu_custom_call.1} parent=0
    #allocation2 [shape = 'u8[65536]{0}', space=vmem, size = 0x10000, scoped, tag = 'input window, operand 4, single buffered']
    #allocation3 [shape = 's32[2]{0}', space=sflag, size = 0x8, scoped, tag = 'scoped memory for tpu_custom_call.1']
    #allocation4 [shape = 's32[2]{0}', space=sflag, size = 0x8, scoped, tag = 'scoped memory for tpu_custom_call.1']
    #allocation5 [shape = 'u8[131072]{0}', space=vmem, size = 0x20000, scoped, tag = 'output window, operand 0']
    %11 = vsyncpa [#allocation3], 0
    %12 = vsyncpa [#allocation4], 0
    %s13 = scalar_lea.sflag [#allocation4], 1
    %14 = vsyncpa %s13, 0
    loop: start=0, step=1, limit=4
    $region2: #{tpu_custom_call.1} parent=1 // loop_pre_header
      _
    $region3: #{tpu_custom_call.1} parent=1 // loop_header
      %s16 = sphi 0, %s20
      %p17 = scmp.ge.s32.totalorder %s16, 4
      %s26 = sphi 0, %s28
      %s29 = sphi 0, %s26
      %s30 = sphi 0, %s29
      %s46 = sphi 0, %s30
      %s50 = sphi 0, %s50
      %s52 = sphi 0, %s50
      %s53 = sphi 0, %s52
      %s67 = sphi 0, %s53
      %s71 = sphi 0, %s71
      %s73 = sphi 0, %s71
      %s74 = sphi 0, %s73
      %s88 = sphi 0, %s74
      %s92 = sphi 0, %s92
      %s94 = sphi 0, %s92
      %s95 = sphi 0, %s94
      %s109 = sphi 0, %s95
      %s113 = sphi 0, %s113
      %s115 = sphi 0, %s113
      %s116 = sphi 0, %s115
      %s130 = sphi 0, %s116
      %s134 = sphi 0, %s134
      %s136 = sphi 0, %s134
      %s137 = sphi 0, %s136
      %s151 = sphi 0, %s137
      %s157 = sphi 0, %s159
      %s160 = sphi 0, %s157
      %s161 = sphi 0, %s160
      %s177 = sphi 0, %s161
    $region4: #{tpu_custom_call.1} parent=1 // loop_header_branch
      %19 = sbr.rel (%p17) target = $region8
    $region5: #{tpu_custom_call.1} parent=1 // loop_body
      %s21 = ssub.s32 %s16, 1
      %s22 = ssub.s32 %s16, 2
      %s23 = sadd.s32 %s16, 1
      %s24 = ssub.s32 %s16, %s23
      %p25 = scmp.eq.s32.totalorder %s24, 0
      %s27 = sadd.s32 %s26, 1
      %s28 = scalar_select %p25, %s26, %s27
      %p31 = pneg %p25
      %p32 = scmp.eq.s32.totalorder %s16, 1
      %p33 = por %p31, %p32
      %p34 = scmp.ne.s32.totalorder %s26, %s29
      %p35 = scmp.eq.s32.totalorder %s16, 0
      %p36 = por %p34, %p35
      %p37 = scmp.ne.s32.totalorder %s26, %s29
      %p38 = scmp.eq.s32.totalorder %s21, 1
      %p39 = por %p37, %p38
      %p40 = scmp.ne.s32.totalorder %s29, %s30
      %p41 = scmp.eq.s32.totalorder %s21, 0
      %p42 = por %p40, %p41
      %p43 = scmp.ne.s32.totalorder %s29, %s30
      %p44 = scmp.eq.s32.totalorder %s22, 1
      %p45 = por %p43, %p44
      %p47 = scmp.ne.s32.totalorder %s30, %s46
      %p48 = scmp.eq.s32.totalorder %s22, 0
      %p49 = por %p47, %p48
      %s51 = sadd.s32 %s50, 1
      %p54 = scmp.eq.s32.totalorder %s16, 1
      %p55 = scmp.ne.s32.totalorder %s50, %s52
      %p56 = scmp.eq.s32.totalorder %s16, 0
      %p57 = por %p55, %p56
      %p58 = scmp.ne.s32.totalorder %s50, %s52
      %p59 = scmp.eq.s32.totalorder %s21, 1
      %p60 = por %p58, %p59
      %p61 = scmp.ne.s32.totalorder %s52, %s53
      %p62 = scmp.eq.s32.totalorder %s21, 0
      %p63 = por %p61, %p62
      %p64 = scmp.ne.s32.totalorder %s52, %s53
      %p65 = scmp.eq.s32.totalorder %s22, 1
      %p66 = por %p64, %p65
      %p68 = scmp.ne.s32.totalorder %s53, %s67
      %p69 = scmp.eq.s32.totalorder %s22, 0
      %p70 = por %p68, %p69
      %s72 = sadd.s32 %s71, 1
      %p75 = scmp.eq.s32.totalorder %s16, 1
      %p76 = scmp.ne.s32.totalorder %s71, %s73
      %p77 = scmp.eq.s32.totalorder %s16, 0
      %p78 = por %p76, %p77
      %p79 = scmp.ne.s32.totalorder %s71, %s73
      %p80 = scmp.eq.s32.totalorder %s21, 1
      %p81 = por %p79, %p80
      %p82 = scmp.ne.s32.totalorder %s73, %s74
      %p83 = scmp.eq.s32.totalorder %s21, 0
      %p84 = por %p82, %p83
      %p85 = scmp.ne.s32.totalorder %s73, %s74
      %p86 = scmp.eq.s32.totalorder %s22, 1
      %p87 = por %p85, %p86
      %p89 = scmp.ne.s32.totalorder %s74, %s88
      %p90 = scmp.eq.s32.totalorder %s22, 0
      %p91 = por %p89, %p90
      %s93 = sadd.s32 %s92, 1
      %p96 = scmp.eq.s32.totalorder %s16, 1
      %p97 = scmp.ne.s32.totalorder %s92, %s94
      %p98 = scmp.eq.s32.totalorder %s16, 0
      %p99 = por %p97, %p98
      %p100 = scmp.ne.s32.totalorder %s92, %s94
      %p101 = scmp.eq.s32.totalorder %s21, 1
      %p102 = por %p100, %p101
      %p103 = scmp.ne.s32.totalorder %s94, %s95
      %p104 = scmp.eq.s32.totalorder %s21, 0
      %p105 = por %p103, %p104
      %p106 = scmp.ne.s32.totalorder %s94, %s95
      %p107 = scmp.eq.s32.totalorder %s22, 1
      %p108 = por %p106, %p107
      %p110 = scmp.ne.s32.totalorder %s95, %s109
      %p111 = scmp.eq.s32.totalorder %s22, 0
      %p112 = por %p110, %p111
      %s114 = sadd.s32 %s113, 1
      %p117 = scmp.eq.s32.totalorder %s16, 1
      %p118 = scmp.ne.s32.totalorder %s113, %s115
      %p119 = scmp.eq.s32.totalorder %s16, 0
      %p120 = por %p118, %p119
      %p121 = scmp.ne.s32.totalorder %s113, %s115
      %p122 = scmp.eq.s32.totalorder %s21, 1
      %p123 = por %p121, %p122
      %p124 = scmp.ne.s32.totalorder %s115, %s116
      %p125 = scmp.eq.s32.totalorder %s21, 0
      %p126 = por %p124, %p125
      %p127 = scmp.ne.s32.totalorder %s115, %s116
      %p128 = scmp.eq.s32.totalorder %s22, 1
      %p129 = por %p127, %p128
      %p131 = scmp.ne.s32.totalorder %s116, %s130
      %p132 = scmp.eq.s32.totalorder %s22, 0
      %p133 = por %p131, %p132
      %s135 = sadd.s32 %s134, 1
      %p138 = scmp.eq.s32.totalorder %s16, 1
      %p139 = scmp.ne.s32.totalorder %s134, %s136
      %p140 = scmp.eq.s32.totalorder %s16, 0
      %p141 = por %p139, %p140
      %p142 = scmp.ne.s32.totalorder %s134, %s136
      %p143 = scmp.eq.s32.totalorder %s21, 1
      %p144 = por %p142, %p143
      %p145 = scmp.ne.s32.totalorder %s136, %s137
      %p146 = scmp.eq.s32.totalorder %s21, 0
      %p147 = por %p145, %p146
      %p148 = scmp.ne.s32.totalorder %s136, %s137
      %p149 = scmp.eq.s32.totalorder %s22, 1
      %p150 = por %p148, %p149
      %p152 = scmp.ne.s32.totalorder %s137, %s151
      %p153 = scmp.eq.s32.totalorder %s22, 0
      %p154 = por %p152, %p153
      %s155 = ssub.s32 %s16, %s23
      %p156 = scmp.eq.s32.totalorder %s155, 0
      %s158 = sadd.s32 %s157, 1
      %s159 = scalar_select %p156, %s157, %s158
      %p162 = pneg %p156
      %p163 = scmp.eq.s32.totalorder %s16, 1
      %p164 = por %p162, %p163
      %p165 = scmp.ne.s32.totalorder %s157, %s160
      %p166 = scmp.eq.s32.totalorder %s16, 0
      %p167 = por %p165, %p166
      %p168 = scmp.ne.s32.totalorder %s157, %s160
      %p169 = scmp.eq.s32.totalorder %s21, 1
      %p170 = por %p168, %p169
      %p171 = scmp.ne.s32.totalorder %s160, %s161
      %p172 = scmp.eq.s32.totalorder %s21, 0
      %p173 = por %p171, %p172
      %p174 = scmp.ne.s32.totalorder %s160, %s161
      %p175 = scmp.eq.s32.totalorder %s22, 1
      %p176 = por %p174, %p175
      %p178 = scmp.ne.s32.totalorder %s161, %s177
      %p179 = scmp.eq.s32.totalorder %s22, 0
      %p180 = por %p178, %p179
      %p181 = scmp.le.s32.totalorder 1, %s16
      %p182 = scmp.lt.s32.totalorder %s16, 3
      %p183 = pnand %p181, %p182
      %p184 = pneg %p183
      // Predicated region
      $region9: #{tpu_custom_call.1} parent=5 // pred_check
        _
      $region10: #{tpu_custom_call.1} parent=5 // pred_check_branch
        %186 = sbr.rel (%p183) target = $region12
      $region11: #{tpu_custom_call.1} parent=5 // pred_region
        %s187 = ssub.s32 %s16, 1
        // Predicated region
        $region13: #{tpu_custom_call.1} parent=11 // pred_check
          %p188 = pneg %p63
        $region14: #{tpu_custom_call.1} parent=11 // pred_check_branch
          %190 = sbr.rel (%p188) target = $region16
        $region15: #{tpu_custom_call.1} parent=11 // pred_region
          _
        $region16: #{tpu_custom_call.1} parent=11 // pred_fallthru
          _
        // Predicated region
        $region17: #{tpu_custom_call.1} parent=11 // pred_check
          %p191 = pneg %p84
        $region18: #{tpu_custom_call.1} parent=11 // pred_check_branch
          %193 = sbr.rel (%p191) target = $region20
        $region19: #{tpu_custom_call.1} parent=11 // pred_region
          _
        $region20: #{tpu_custom_call.1} parent=11 // pred_fallthru
          _
        // Predicated region
        $region21: #{tpu_custom_call.1} parent=11 // pred_check
          %p194 = pneg %p105
        $region22: #{tpu_custom_call.1} parent=11 // pred_check_branch
          %196 = sbr.rel (%p194) target = $region24
        $region23: #{tpu_custom_call.1} parent=11 // pred_region
          _
        $region24: #{tpu_custom_call.1} parent=11 // pred_fallthru
          _
        // Predicated region
        $region25: #{tpu_custom_call.1} parent=11 // pred_check
          %p197 = pneg %p126
        $region26: #{tpu_custom_call.1} parent=11 // pred_check_branch
          %199 = sbr.rel (%p197) target = $region28
        $region27: #{tpu_custom_call.1} parent=11 // pred_region
          %s201 = ssub.s32 2048, 2048
          %202 = vsyncadd [#allocation3], %s201
          %s203 = sshll.u32 [#allocation2], 4
          %s204 = int_to_ptr.vmem [resolvable:$true] %s203
          %209 = dma.hbm_to_vmem [thread:$0]  %s4, 2048, %s204, [#allocation3], 128, 128, 8
        $region28: #{tpu_custom_call.1} parent=11 // pred_fallthru
          _
        // Predicated region
        $region29: #{tpu_custom_call.1} parent=11 // pred_check
          %p210 = pneg %p147
        $region30: #{tpu_custom_call.1} parent=11 // pred_check_branch
          %212 = sbr.rel (%p210) target = $region32
        $region31: #{tpu_custom_call.1} parent=11 // pred_region
          _
        $region32: #{tpu_custom_call.1} parent=11 // pred_fallthru
          _
      $region12: #{tpu_custom_call.1} parent=5 // pred_fallthru
        _
      %p213 = scmp.lt.s32.totalorder %s16, 2
      // Predicated region
      $region33: #{tpu_custom_call.1} parent=5 // pred_check
        %p214 = pneg %p213
      $region34: #{tpu_custom_call.1} parent=5 // pred_check_branch
        %216 = sbr.rel (%p214) target = $region36
      $region35: #{tpu_custom_call.1} parent=5 // pred_region
        // Predicated region
        $region37: #{tpu_custom_call.1} parent=35 // pred_check
          %p217 = pneg %p36
        $region38: #{tpu_custom_call.1} parent=35 // pred_check_branch
          %219 = sbr.rel (%p217) target = $region40
        $region39: #{tpu_custom_call.1} parent=35 // pred_region
          %s220 = smul.u32 16, %s16
          %p221 = scmp.lt.s32.totalorder %s220, 31
          %s222 = scalar_select %p221, %s220, 31
          %s223 = smul.addr %s222, 8
          %s224 = scalar_lea.vmem %s0, %s223
          %s225 = smul.u32 16, %s16
        $region40: #{tpu_custom_call.1} parent=35 // pred_fallthru
          _
      $region36: #{tpu_custom_call.1} parent=5 // pred_fallthru
        _
      %p226 = scmp.le.s32.totalorder 1, %s16
      %p227 = scmp.lt.s32.totalorder %s16, 3
      %p228 = pnand %p226, %p227
      %p229 = pneg %p228
      // Predicated region
      $region41: #{tpu_custom_call.1} parent=5 // pred_check
        _
      $region42: #{tpu_custom_call.1} parent=5 // pred_check_branch
        %231 = sbr.rel (%p228) target = $region44
      $region43: #{tpu_custom_call.1} parent=5 // pred_region
        %s232 = ssub.s32 %s16, 1
        // Predicated region
        $region45: #{tpu_custom_call.1} parent=43 // pred_check
          %p233 = pneg %p126
        $region46: #{tpu_custom_call.1} parent=43 // pred_check_branch
          %235 = sbr.rel (%p233) target = $region48
        $region47: #{tpu_custom_call.1} parent=43 // pred_region
          %236 = dma.done [#allocation3], 2048
        $region48: #{tpu_custom_call.1} parent=43 // pred_fallthru
          _
        %s237 = smul.u32 16, %s21
        %p238 = scmp.lt.s32.totalorder %s237, 31
        %s239 = scalar_select %p238, %s237, 31
        %s240 = smul.addr %s239, 8
        %s241 = scalar_lea.vmem %s0, %s240
        %p242 = pneg %p42
        %p243 = pneg %p39
        %p244 = pneg %p63
        %p245 = pneg %p60
        %p246 = pneg %p84
        %p247 = pneg %p81
        %p248 = pneg %p105
        %p249 = pneg %p102
        %p250 = pneg %p126
        %p251 = pneg %p123
        %p252 = pneg %p147
        %p253 = pneg %p144
        %p254 = pneg %p173
        %p255 = pneg %p170
        %s256 = sand.u32 %s160, 1
        %s257 = scalar_lea.sflag [#allocation4], %s256
        %s258 = sand.u32 %s160, 1
        %s259 = smul.addr %s258, 128
        %s260 = scalar_lea.vmem [#allocation5], %s259
        %s261 = smul.u32 16, %s21
        %p262 = scmp.lt.s32.totalorder %s261, 31
        %s263 = scalar_select %p262, %s261, 31
        %s264 = smul.addr %s263, 8
        %s265 = scalar_lea.vmem %s0, %s264
        %s266 = smul.u32 16, %s21
        %s267 = smul.u32 16, %s21
        %v268 = vld [vmem:[%s265] sm:$0xff]
        %v269 = vld [vmem:[%s265 + $0x8] sm:$0xff]
        %v270 = vld [vmem:[%s265 + $0x10] sm:$0xff]
        %v271 = vld [vmem:[%s265 + $0x18] sm:$0xff]
        %v272 = vld [vmem:[%s265 + $0x20] sm:$0xff]
        %v273 = vld [vmem:[%s265 + $0x28] sm:$0xff]
        %v274 = vld [vmem:[%s265 + $0x30] sm:$0xff]
        %v275 = vld [vmem:[%s265 + $0x38] sm:$0xff]
        %v276 = vld [vmem:[%s265 + $0x40] sm:$0xff]
        %v277 = vld [vmem:[%s265 + $0x48] sm:$0xff]
        %v278 = vld [vmem:[%s265 + $0x50] sm:$0xff]
        %v279 = vld [vmem:[%s265 + $0x58] sm:$0xff]
        %v280 = vld [vmem:[%s265 + $0x60] sm:$0xff]
        %v281 = vld [vmem:[%s265 + $0x68] sm:$0xff]
        %v282 = vld [vmem:[%s265 + $0x70] sm:$0xff]
        %v283 = vld [vmem:[%s265 + $0x78] sm:$0xff]
        %v284 = vlaneseq
        %v285 = vand.u32 %v284, 127
        %286 = vset.pattern.permute.xlu0 0
        %287 = vperm.xlu0 %286, %v268
        %v288 = vpop.permute.xlu0 %287
        %289 = vset.pattern.permute.xlu0 0
        %290 = vperm.xlu0 %289, %v269
        %v291 = vpop.permute.xlu0 %290
        %292 = vset.pattern.permute.xlu0 0
        %293 = vperm.xlu0 %292, %v270
        %v294 = vpop.permute.xlu0 %293
        %295 = vset.pattern.permute.xlu0 0
        %296 = vperm.xlu0 %295, %v271
        %v297 = vpop.permute.xlu0 %296
        %298 = vset.pattern.permute.xlu0 0
        %299 = vperm.xlu0 %298, %v272
        %v300 = vpop.permute.xlu0 %299
        %301 = vset.pattern.permute.xlu0 0
        %302 = vperm.xlu0 %301, %v273
        %v303 = vpop.permute.xlu0 %302
        %304 = vset.pattern.permute.xlu0 0
        %305 = vperm.xlu0 %304, %v274
        %v306 = vpop.permute.xlu0 %305
        %307 = vset.pattern.permute.xlu0 0
        %308 = vperm.xlu0 %307, %v275
        %v309 = vpop.permute.xlu0 %308
        %310 = vset.pattern.permute.xlu0 0
        %311 = vperm.xlu0 %310, %v276
        %v312 = vpop.permute.xlu0 %311
        %313 = vset.pattern.permute.xlu0 0
        %314 = vperm.xlu0 %313, %v277
        %v315 = vpop.permute.xlu0 %314
        %316 = vset.pattern.permute.xlu0 0
        %317 = vperm.xlu0 %316, %v278
        %v318 = vpop.permute.xlu0 %317
        %319 = vset.pattern.permute.xlu0 0
        %320 = vperm.xlu0 %319, %v279
        %v321 = vpop.permute.xlu0 %320
        %322 = vset.pattern.permute.xlu0 0
        %323 = vperm.xlu0 %322, %v280
        %v324 = vpop.permute.xlu0 %323
        %325 = vset.pattern.permute.xlu0 0
        %326 = vperm.xlu0 %325, %v281
        %v327 = vpop.permute.xlu0 %326
        %328 = vset.pattern.permute.xlu0 0
        %329 = vperm.xlu0 %328, %v282
        %v330 = vpop.permute.xlu0 %329
        %331 = vset.pattern.permute.xlu0 0
        %332 = vperm.xlu0 %331, %v283
        %v333 = vpop.permute.xlu0 %332
        %vm334 = vcmp.eq.s32.totalorder %v285, %v288
        %vm335 = vcmp.eq.s32.totalorder %v285, %v291
        %vm336 = vcmp.eq.s32.totalorder %v285, %v294
        %vm337 = vcmp.eq.s32.totalorder %v285, %v297
        %vm338 = vcmp.eq.s32.totalorder %v285, %v300
        %vm339 = vcmp.eq.s32.totalorder %v285, %v303
        %vm340 = vcmp.eq.s32.totalorder %v285, %v306
        %vm341 = vcmp.eq.s32.totalorder %v285, %v309
        %vm342 = vcmp.eq.s32.totalorder %v285, %v312
        %vm343 = vcmp.eq.s32.totalorder %v285, %v315
        %vm344 = vcmp.eq.s32.totalorder %v285, %v318
        %vm345 = vcmp.eq.s32.totalorder %v285, %v321
        %vm346 = vcmp.eq.s32.totalorder %v285, %v324
        %vm347 = vcmp.eq.s32.totalorder %v285, %v327
        %vm348 = vcmp.eq.s32.totalorder %v285, %v330
        %vm349 = vcmp.eq.s32.totalorder %v285, %v333
        %v350 = vsel %vm334, 1, 0
        %v351 = vsel %vm335, 1, 0
        %v352 = vsel %vm336, 1, 0
        %v353 = vsel %vm337, 1, 0
        %v354 = vsel %vm338, 1, 0
        %v355 = vsel %vm339, 1, 0
        %v356 = vsel %vm340, 1, 0
        %v357 = vsel %vm341, 1, 0
        %v358 = vsel %vm342, 1, 0
        %v359 = vsel %vm343, 1, 0
        %v360 = vsel %vm344, 1, 0
        %v361 = vsel %vm345, 1, 0
        %v362 = vsel %vm346, 1, 0
        %v363 = vsel %vm347, 1, 0
        %v364 = vsel %vm348, 1, 0
        %v365 = vsel %vm349, 1, 0
        %v366 = vcvt.s32.f32 %v350
        %v367 = vcvt.s32.f32 %v351
        %v368 = vcvt.s32.f32 %v352
        %v369 = vcvt.s32.f32 %v353
        %v370 = vcvt.s32.f32 %v354
        %v371 = vcvt.s32.f32 %v355
        %v372 = vcvt.s32.f32 %v356
        %v373 = vcvt.s32.f32 %v357
        %v374 = vcvt.s32.f32 %v358
        %v375 = vcvt.s32.f32 %v359
        %v376 = vcvt.s32.f32 %v360
        %v377 = vcvt.s32.f32 %v361
        %v378 = vcvt.s32.f32 %v362
        %v379 = vcvt.s32.f32 %v363
        %v380 = vcvt.s32.f32 %v364
        %v381 = vcvt.s32.f32 %v365
        %382 = vset.pattern.permute.xlu0 1
        %383 = vperm.xlu0 %382, %v268
        %v384 = vpop.permute.xlu0 %383
        %385 = vset.pattern.permute.xlu0 1
        %386 = vperm.xlu0 %385, %v269
        %v387 = vpop.permute.xlu0 %386
        %388 = vset.pattern.permute.xlu0 1
        %389 = vperm.xlu0 %388, %v270
        %v390 = vpop.permute.xlu0 %389
        %391 = vset.pattern.permute.xlu0 1
        %392 = vperm.xlu0 %391, %v271
        %v393 = vpop.permute.xlu0 %392
        %394 = vset.pattern.permute.xlu0 1
        %395 = vperm.xlu0 %394, %v272
        %v396 = vpop.permute.xlu0 %395
        %397 = vset.pattern.permute.xlu0 1
        %398 = vperm.xlu0 %397, %v273
        %v399 = vpop.permute.xlu0 %398
        %400 = vset.pattern.permute.xlu0 1
        %401 = vperm.xlu0 %400, %v274
        %v402 = vpop.permute.xlu0 %401
        %403 = vset.pattern.permute.xlu0 1
        %404 = vperm.xlu0 %403, %v275
        %v405 = vpop.permute.xlu0 %404
        %406 = vset.pattern.permute.xlu0 1
        %407 = vperm.xlu0 %406, %v276
        %v408 = vpop.permute.xlu0 %407
        %409 = vset.pattern.permute.xlu0 1
        %410 = vperm.xlu0 %409, %v277
        %v411 = vpop.permute.xlu0 %410
        %412 = vset.pattern.permute.xlu0 1
        %413 = vperm.xlu0 %412, %v278
        %v414 = vpop.permute.xlu0 %413
        %415 = vset.pattern.permute.xlu0 1
        %416 = vperm.xlu0 %415, %v279
        %v417 = vpop.permute.xlu0 %416
        %418 = vset.pattern.permute.xlu0 1
        %419 = vperm.xlu0 %418, %v280
        %v420 = vpop.permute.xlu0 %419
        %421 = vset.pattern.permute.xlu0 1
        %422 = vperm.xlu0 %421, %v281
        %v423 = vpop.permute.xlu0 %422
        %424 = vset.pattern.permute.xlu0 1
        %425 = vperm.xlu0 %424, %v282
        %v426 = vpop.permute.xlu0 %425
        %427 = vset.pattern.permute.xlu0 1
        %428 = vperm.xlu0 %427, %v283
        %v429 = vpop.permute.xlu0 %428
        %vm430 = vcmp.eq.s32.totalorder %v285, %v384
        %vm431 = vcmp.eq.s32.totalorder %v285, %v387
        %vm432 = vcmp.eq.s32.totalorder %v285, %v390
        %vm433 = vcmp.eq.s32.totalorder %v285, %v393
        %vm434 = vcmp.eq.s32.totalorder %v285, %v396
        %vm435 = vcmp.eq.s32.totalorder %v285, %v399
        %vm436 = vcmp.eq.s32.totalorder %v285, %v402
        %vm437 = vcmp.eq.s32.totalorder %v285, %v405
        %vm438 = vcmp.eq.s32.totalorder %v285, %v408
        %vm439 = vcmp.eq.s32.totalorder %v285, %v411
        %vm440 = vcmp.eq.s32.totalorder %v285, %v414
        %vm441 = vcmp.eq.s32.totalorder %v285, %v417
        %vm442 = vcmp.eq.s32.totalorder %v285, %v420
        %vm443 = vcmp.eq.s32.totalorder %v285, %v423
        %vm444 = vcmp.eq.s32.totalorder %v285, %v426
        %vm445 = vcmp.eq.s32.totalorder %v285, %v429
        %v446 = vsel %vm430, 1, 0
        %v447 = vsel %vm431, 1, 0
        %v448 = vsel %vm432, 1, 0
        %v449 = vsel %vm433, 1, 0
        %v450 = vsel %vm434, 1, 0
        %v451 = vsel %vm435, 1, 0
        %v452 = vsel %vm436, 1, 0
        %v453 = vsel %vm437, 1, 0
        %v454 = vsel %vm438, 1, 0
        %v455 = vsel %vm439, 1, 0
        %v456 = vsel %vm440, 1, 0
        %v457 = vsel %vm441, 1, 0
        %v458 = vsel %vm442, 1, 0
        %v459 = vsel %vm443, 1, 0
        %v460 = vsel %vm444, 1, 0
        %v461 = vsel %vm445, 1, 0
        %v462 = vcvt.s32.f32 %v446
        %v463 = vcvt.s32.f32 %v447
        %v464 = vcvt.s32.f32 %v448
        %v465 = vcvt.s32.f32 %v449
        %v466 = vcvt.s32.f32 %v450
        %v467 = vcvt.s32.f32 %v451
        %v468 = vcvt.s32.f32 %v452
        %v469 = vcvt.s32.f32 %v453
        %v470 = vcvt.s32.f32 %v454
        %v471 = vcvt.s32.f32 %v455
        %v472 = vcvt.s32.f32 %v456
        %v473 = vcvt.s32.f32 %v457
        %v474 = vcvt.s32.f32 %v458
        %v475 = vcvt.s32.f32 %v459
        %v476 = vcvt.s32.f32 %v460
        %v477 = vcvt.s32.f32 %v461
        %v478 = vld [vmem:[%s1] sm:$0xff]
        %v479 = vld [vmem:[%s1 + $0x8] sm:$0xff]
        %v480 = vld [vmem:[%s1 + $0x10] sm:$0xff]
        %v481 = vld [vmem:[%s1 + $0x18] sm:$0xff]
        %v482 = vld [vmem:[%s1 + $0x20] sm:$0xff]
        %v483 = vld [vmem:[%s1 + $0x28] sm:$0xff]
        %v484 = vld [vmem:[%s1 + $0x30] sm:$0xff]
        %v485 = vld [vmem:[%s1 + $0x38] sm:$0xff]
        %v486 = vld [vmem:[%s1 + $0x40] sm:$0xff]
        %v487 = vld [vmem:[%s1 + $0x48] sm:$0xff]
        %v488 = vld [vmem:[%s1 + $0x50] sm:$0xff]
        %v489 = vld [vmem:[%s1 + $0x58] sm:$0xff]
        %v490 = vld [vmem:[%s1 + $0x60] sm:$0xff]
        %v491 = vld [vmem:[%s1 + $0x68] sm:$0xff]
        %v492 = vld [vmem:[%s1 + $0x70] sm:$0xff]
        %v493 = vld [vmem:[%s1 + $0x78] sm:$0xff]
        %v494 = vld [vmem:[%s2] sm:$0xff]
        %v495 = vld [vmem:[%s2 + $0x8] sm:$0xff]
        %v496 = vld [vmem:[%s2 + $0x10] sm:$0xff]
        %v497 = vld [vmem:[%s2 + $0x18] sm:$0xff]
        %v498 = vld [vmem:[%s2 + $0x20] sm:$0xff]
        %v499 = vld [vmem:[%s2 + $0x28] sm:$0xff]
        %v500 = vld [vmem:[%s2 + $0x30] sm:$0xff]
        %v501 = vld [vmem:[%s2 + $0x38] sm:$0xff]
        %v502 = vld [vmem:[%s2 + $0x40] sm:$0xff]
        %v503 = vld [vmem:[%s2 + $0x48] sm:$0xff]
        %v504 = vld [vmem:[%s2 + $0x50] sm:$0xff]
        %v505 = vld [vmem:[%s2 + $0x58] sm:$0xff]
        %v506 = vld [vmem:[%s2 + $0x60] sm:$0xff]
        %v507 = vld [vmem:[%s2 + $0x68] sm:$0xff]
        %v508 = vld [vmem:[%s2 + $0x70] sm:$0xff]
        %v509 = vld [vmem:[%s2 + $0x78] sm:$0xff]
        %510 = vmatprep.subr.mxu0 0.0
        %511 = vmatpush1.msra.mxu0 %v494
        %512 = vmatprep.subr.mxu0 0.0
        %513 = vmatpush1.msra.mxu0 %v495
        %514 = vmatprep.subr.mxu0 0.0
        %515 = vmatpush1.msra.mxu0 %v496
        %516 = vmatprep.subr.mxu0 0.0
        %517 = vmatpush1.msra.mxu0 %v497
        %518 = vmatprep.subr.mxu0 0.0
        %519 = vmatpush1.msra.mxu0 %v498
        %520 = vmatprep.subr.mxu0 0.0
        %521 = vmatpush1.msra.mxu0 %v499
        %522 = vmatprep.subr.mxu0 0.0
        %523 = vmatpush1.msra.mxu0 %v500
        %524 = vmatprep.subr.mxu0 0.0
        %525 = vmatpush1.msra.mxu0 %v501
        %526 = vmatprep.subr.mxu0 0.0
        %527 = vmatpush1.msra.mxu0 %v502
        %528 = vmatprep.subr.mxu0 0.0
        %529 = vmatpush1.msra.mxu0 %v503
        %530 = vmatprep.subr.mxu0 0.0
        %531 = vmatpush1.msra.mxu0 %v504
        %532 = vmatprep.subr.mxu0 0.0
        %533 = vmatpush1.msra.mxu0 %v505
        %534 = vmatprep.subr.mxu0 0.0
        %535 = vmatpush1.msra.mxu0 %v506
        %536 = vmatprep.subr.mxu0 0.0
        %537 = vmatpush1.msra.mxu0 %v507
        %538 = vmatprep.subr.mxu0 0.0
        %539 = vmatpush1.msra.mxu0 %v508
        %540 = vmatprep.subr.mxu0 0.0
        %541 = vmatpush1.msra.mxu0 %v509
        %542 = vmatprep.subr.mxu0 0.0
        %543 = vmatpush1.msra.mxu0 0.0
        %544 = vmatprep.subr.mxu0 0.0
        %545 = vmatpush1.msra.mxu0 0.0
        %546 = vmatprep.subr.mxu0 0.0
        %547 = vmatpush1.msra.mxu0 0.0
        %548 = vmatprep.subr.mxu0 0.0
        %549 = vmatpush1.msra.mxu0 0.0
        %550 = vmatprep.subr.mxu0 0.0
        %551 = vmatpush1.msra.mxu0 0.0
        %552 = vmatprep.subr.mxu0 0.0
        %553 = vmatpush1.msra.mxu0 0.0
        %554 = vmatprep.subr.mxu0 0.0
        %555 = vmatpush1.msra.mxu0 0.0
        %556 = vmatprep.subr.mxu0 0.0
        %557 = vmatpush1.msra.mxu0 0.0
        %558 = vmatprep.subr.mxu0 0.0
        %559 = vmatpush1.msra.mxu0 0.0
        %560 = vmatprep.subr.mxu0 0.0
        %561 = vmatpush1.msra.mxu0 0.0
        %562 = vmatprep.subr.mxu0 0.0
        %563 = vmatpush1.msra.mxu0 0.0
        %564 = vmatprep.subr.mxu0 0.0
        %565 = vmatpush1.msra.mxu0 0.0
        %566 = vmatprep.subr.mxu0 0.0
        %567 = vmatpush1.msra.mxu0 0.0
        %568 = vmatprep.subr.mxu0 0.0
        %569 = vmatpush1.msra.mxu0 0.0
        %570 = vmatprep.subr.mxu0 0.0
        %571 = vmatpush1.msra.mxu0 0.0
        %572 = vmatprep.subr.mxu0 0.0
        %573 = vmatpush1.msra.mxu0 0.0
        %574 = vmatprep.mubr.f32.mxu0 0.0
        %575 = vmatmul.mubr.f32.gmra.mrb[0].mxu0 %v462
        %v576 = vpop.f32.mrb[0].mxu0
        %v577 = vadd.f32 0.0, %v576
        %v578 = vpop.f32.mrb[0].mxu0
        %579 = vmatprep.mubr.f32.mxu0 0.0
        %580 = vmatmul.mubr.f32.gmra.mrb[0].mxu0 %v463
        %v581 = vpop.f32.mrb[0].mxu0
        %v582 = vadd.f32 0.0, %v581
        %v583 = vpop.f32.mrb[0].mxu0
        %584 = vmatprep.mubr.f32.mxu0 0.0
        %585 = vmatmul.mubr.f32.gmra.mrb[0].mxu0 %v464
        %v586 = vpop.f32.mrb[0].mxu0
        %v587 = vadd.f32 0.0, %v586
        %v588 = vpop.f32.mrb[0].mxu0
        %589 = vmatprep.mubr.f32.mxu0 0.0
        %590 = vmatmul.mubr.f32.gmra.mrb[0].mxu0 %v465
        %v591 = vpop.f32.mrb[0].mxu0
        %v592 = vadd.f32 0.0, %v591
        %v593 = vpop.f32.mrb[0].mxu0
        %594 = vmatprep.mubr.f32.mxu0 0.0
        %595 = vmatmul.mubr.f32.gmra.mrb[0].mxu0 %v466
        %v596 = vpop.f32.mrb[0].mxu0
        %v597 = vadd.f32 0.0, %v596
        %v598 = vpop.f32.mrb[0].mxu0
        %599 = vmatprep.mubr.f32.mxu0 0.0
        %600 = vmatmul.mubr.f32.gmra.mrb[0].mxu0 %v467
        %v601 = vpop.f32.mrb[0].mxu0
        %v602 = vadd.f32 0.0, %v601
        %v603 = vpop.f32.mrb[0].mxu0
        %604 = vmatprep.mubr.f32.mxu0 0.0
        %605 = vmatmul.mubr.f32.gmra.mrb[0].mxu0 %v468
        %v606 = vpop.f32.mrb[0].mxu0
        %v607 = vadd.f32 0.0, %v606
        %v608 = vpop.f32.mrb[0].mxu0
        %609 = vmatprep.mubr.f32.mxu0 0.0
        %610 = vmatmul.mubr.f32.gmra.mrb[0].mxu0 %v469
        %v611 = vpop.f32.mrb[0].mxu0
        %v612 = vadd.f32 0.0, %v611
        %v613 = vpop.f32.mrb[0].mxu0
        %614 = vmatprep.mubr.f32.mxu0 0.0
        %615 = vmatmul.mubr.f32.gmra.mrb[0].mxu0 %v470
        %v616 = vpop.f32.mrb[0].mxu0
        %v617 = vadd.f32 0.0, %v616
        %v618 = vpop.f32.mrb[0].mxu0
        %619 = vmatprep.mubr.f32.mxu0 0.0
        %620 = vmatmul.mubr.f32.gmra.mrb[0].mxu0 %v471
        %v621 = vpop.f32.mrb[0].mxu0
        %v622 = vadd.f32 0.0, %v621
        %v623 = vpop.f32.mrb[0].mxu0
        %624 = vmatprep.mubr.f32.mxu0 0.0
        %625 = vmatmul.mubr.f32.gmra.mrb[0].mxu0 %v472
        %v626 = vpop.f32.mrb[0].mxu0
        %v627 = vadd.f32 0.0, %v626
        %v628 = vpop.f32.mrb[0].mxu0
        %629 = vmatprep.mubr.f32.mxu0 0.0
        %630 = vmatmul.mubr.f32.gmra.mrb[0].mxu0 %v473
        %v631 = vpop.f32.mrb[0].mxu0
        %v632 = vadd.f32 0.0, %v631
        %v633 = vpop.f32.mrb[0].mxu0
        %634 = vmatprep.mubr.f32.mxu0 0.0
        %635 = vmatmul.mubr.f32.gmra.mrb[0].mxu0 %v474
        %v636 = vpop.f32.mrb[0].mxu0
        %v637 = vadd.f32 0.0, %v636
        %v638 = vpop.f32.mrb[0].mxu0
        %639 = vmatprep.mubr.f32.mxu0 0.0
        %640 = vmatmul.mubr.f32.gmra.mrb[0].mxu0 %v475
        %v641 = vpop.f32.mrb[0].mxu0
        %v642 = vadd.f32 0.0, %v641
        %v643 = vpop.f32.mrb[0].mxu0
        %644 = vmatprep.mubr.f32.mxu0 0.0
        %645 = vmatmul.mubr.f32.gmra.mrb[0].mxu0 %v476
        %v646 = vpop.f32.mrb[0].mxu0
        %v647 = vadd.f32 0.0, %v646
        %v648 = vpop.f32.mrb[0].mxu0
        %649 = vmatprep.mubr.f32.mxu0 0.0
        %650 = vmatmul.mubr.f32.gmra.mrb[0].mxu0 %v477
        %v651 = vpop.f32.mrb[0].mxu0
        %v652 = vadd.f32 0.0, %v651
        %v653 = vpop.f32.mrb[0].mxu0
        %654 = vdwg.mxu0
        %655 = vmatprep.subr.mxu0 0.0
        %656 = vmatpush1.msra.mxu0 %v478
        %657 = vmatprep.subr.mxu0 0.0
        %658 = vmatpush1.msra.mxu0 %v479
        %659 = vmatprep.subr.mxu0 0.0
        %660 = vmatpush1.msra.mxu0 %v480
        %661 = vmatprep.subr.mxu0 0.0
        %662 = vmatpush1.msra.mxu0 %v481
        %663 = vmatprep.subr.mxu0 0.0
        %664 = vmatpush1.msra.mxu0 %v482
        %665 = vmatprep.subr.mxu0 0.0
        %666 = vmatpush1.msra.mxu0 %v483
        %667 = vmatprep.subr.mxu0 0.0
        %668 = vmatpush1.msra.mxu0 %v484
        %669 = vmatprep.subr.mxu0 0.0
        %670 = vmatpush1.msra.mxu0 %v485
        %671 = vmatprep.subr.mxu0 0.0
        %672 = vmatpush1.msra.mxu0 %v486
        %673 = vmatprep.subr.mxu0 0.0
        %674 = vmatpush1.msra.mxu0 %v487
        %675 = vmatprep.subr.mxu0 0.0
        %676 = vmatpush1.msra.mxu0 %v488
        %677 = vmatprep.subr.mxu0 0.0
        %678 = vmatpush1.msra.mxu0 %v489
        %679 = vmatprep.subr.mxu0 0.0
        %680 = vmatpush1.msra.mxu0 %v490
        %681 = vmatprep.subr.mxu0 0.0
        %682 = vmatpush1.msra.mxu0 %v491
        %683 = vmatprep.subr.mxu0 0.0
        %684 = vmatpush1.msra.mxu0 %v492
        %685 = vmatprep.subr.mxu0 0.0
        %686 = vmatpush1.msra.mxu0 %v493
        %687 = vmatprep.subr.mxu0 0.0
        %688 = vmatpush1.msra.mxu0 0.0
        %689 = vmatprep.subr.mxu0 0.0
        %690 = vmatpush1.msra.mxu0 0.0
        %691 = vmatprep.subr.mxu0 0.0
        %692 = vmatpush1.msra.mxu0 0.0
        %693 = vmatprep.subr.mxu0 0.0
        %694 = vmatpush1.msra.mxu0 0.0
        %695 = vmatprep.subr.mxu0 0.0
        %696 = vmatpush1.msra.mxu0 0.0
        %697 = vmatprep.subr.mxu0 0.0
        %698 = vmatpush1.msra.mxu0 0.0
        %699 = vmatprep.subr.mxu0 0.0
        %700 = vmatpush1.msra.mxu0 0.0
        %701 = vmatprep.subr.mxu0 0.0
        %702 = vmatpush1.msra.mxu0 0.0
        %703 = vmatprep.subr.mxu0 0.0
        %704 = vmatpush1.msra.mxu0 0.0
        %705 = vmatprep.subr.mxu0 0.0
        %706 = vmatpush1.msra.mxu0 0.0
        %707 = vmatprep.subr.mxu0 0.0
        %708 = vmatpush1.msra.mxu0 0.0
        %709 = vmatprep.subr.mxu0 0.0
        %710 = vmatpush1.msra.mxu0 0.0
        %711 = vmatprep.subr.mxu0 0.0
        %712 = vmatpush1.msra.mxu0 0.0
        %713 = vmatprep.subr.mxu0 0.0
        %714 = vmatpush1.msra.mxu0 0.0
        %715 = vmatprep.subr.mxu0 0.0
        %716 = vmatpush1.msra.mxu0 0.0
        %717 = vmatprep.subr.mxu0 0.0
        %718 = vmatpush1.msra.mxu0 0.0
        %719 = vmatprep.mubr.f32.mxu0 0.0
        %720 = vmatmul.mubr.f32.gmra.mrb[0].mxu0 %v366
        %v721 = vpop.f32.mrb[0].mxu0
        %v722 = vadd.f32 %v577, %v721
        %v723 = vpop.f32.mrb[0].mxu0
        %724 = vmatprep.mubr.f32.mxu0 0.0
        %725 = vmatmul.mubr.f32.gmra.mrb[0].mxu0 %v367
        %v726 = vpop.f32.mrb[0].mxu0
        %v727 = vadd.f32 %v582, %v726
        %v728 = vpop.f32.mrb[0].mxu0
        %729 = vmatprep.mubr.f32.mxu0 0.0
        %730 = vmatmul.mubr.f32.gmra.mrb[0].mxu0 %v368
        %v731 = vpop.f32.mrb[0].mxu0
        %v732 = vadd.f32 %v587, %v731
        %v733 = vpop.f32.mrb[0].mxu0
        %734 = vmatprep.mubr.f32.mxu0 0.0
        %735 = vmatmul.mubr.f32.gmra.mrb[0].mxu0 %v369
        %v736 = vpop.f32.mrb[0].mxu0
        %v737 = vadd.f32 %v592, %v736
        %v738 = vpop.f32.mrb[0].mxu0
        %739 = vmatprep.mubr.f32.mxu0 0.0
        %740 = vmatmul.mubr.f32.gmra.mrb[0].mxu0 %v370
        %v741 = vpop.f32.mrb[0].mxu0
        %v742 = vadd.f32 %v597, %v741
        %v743 = vpop.f32.mrb[0].mxu0
        %744 = vmatprep.mubr.f32.mxu0 0.0
        %745 = vmatmul.mubr.f32.gmra.mrb[0].mxu0 %v371
        %v746 = vpop.f32.mrb[0].mxu0
        %v747 = vadd.f32 %v602, %v746
        %v748 = vpop.f32.mrb[0].mxu0
        %749 = vmatprep.mubr.f32.mxu0 0.0
        %750 = vmatmul.mubr.f32.gmra.mrb[0].mxu0 %v372
        %v751 = vpop.f32.mrb[0].mxu0
        %v752 = vadd.f32 %v607, %v751
        %v753 = vpop.f32.mrb[0].mxu0
        %754 = vmatprep.mubr.f32.mxu0 0.0
        %755 = vmatmul.mubr.f32.gmra.mrb[0].mxu0 %v373
        %v756 = vpop.f32.mrb[0].mxu0
        %v757 = vadd.f32 %v612, %v756
        %v758 = vpop.f32.mrb[0].mxu0
        %759 = vmatprep.mubr.f32.mxu0 0.0
        %760 = vmatmul.mubr.f32.gmra.mrb[0].mxu0 %v374
        %v761 = vpop.f32.mrb[0].mxu0
        %v762 = vadd.f32 %v617, %v761
        %v763 = vpop.f32.mrb[0].mxu0
        %764 = vmatprep.mubr.f32.mxu0 0.0
        %765 = vmatmul.mubr.f32.gmra.mrb[0].mxu0 %v375
        %v766 = vpop.f32.mrb[0].mxu0
        %v767 = vadd.f32 %v622, %v766
        %v768 = vpop.f32.mrb[0].mxu0
        %769 = vmatprep.mubr.f32.mxu0 0.0
        %770 = vmatmul.mubr.f32.gmra.mrb[0].mxu0 %v376
        %v771 = vpop.f32.mrb[0].mxu0
        %v772 = vadd.f32 %v627, %v771
        %v773 = vpop.f32.mrb[0].mxu0
        %774 = vmatprep.mubr.f32.mxu0 0.0
        %775 = vmatmul.mubr.f32.gmra.mrb[0].mxu0 %v377
        %v776 = vpop.f32.mrb[0].mxu0
        %v777 = vadd.f32 %v632, %v776
        %v778 = vpop.f32.mrb[0].mxu0
        %779 = vmatprep.mubr.f32.mxu0 0.0
        %780 = vmatmul.mubr.f32.gmra.mrb[0].mxu0 %v378
        %v781 = vpop.f32.mrb[0].mxu0
        %v782 = vadd.f32 %v637, %v781
        %v783 = vpop.f32.mrb[0].mxu0
        %784 = vmatprep.mubr.f32.mxu0 0.0
        %785 = vmatmul.mubr.f32.gmra.mrb[0].mxu0 %v379
        %v786 = vpop.f32.mrb[0].mxu0
        %v787 = vadd.f32 %v642, %v786
        %v788 = vpop.f32.mrb[0].mxu0
        %789 = vmatprep.mubr.f32.mxu0 0.0
        %790 = vmatmul.mubr.f32.gmra.mrb[0].mxu0 %v380
        %v791 = vpop.f32.mrb[0].mxu0
        %v792 = vadd.f32 %v647, %v791
        %v793 = vpop.f32.mrb[0].mxu0
        %794 = vmatprep.mubr.f32.mxu0 0.0
        %795 = vmatmul.mubr.f32.gmra.mrb[0].mxu0 %v381
        %v796 = vpop.f32.mrb[0].mxu0
        %v797 = vadd.f32 %v652, %v796
        %v798 = vpop.f32.mrb[0].mxu0
        %799 = vdwg.mxu0
        %v800 = vld [vmem:[%s3] sm:$0x1]
        %v802 = vlaneseq
        %v803 = vshrl.u32 %v802, 7
        %v804 = vsub.s32 0, %v803
        %v805 = vrot.slane %v800, %v804
        %v807 = vadd.f32 %v722, %v805
        %v808 = vadd.f32 %v727, %v805
        %v809 = vadd.f32 %v732, %v805
        %v810 = vadd.f32 %v737, %v805
        %v811 = vadd.f32 %v742, %v805
        %v812 = vadd.f32 %v747, %v805
        %v813 = vadd.f32 %v752, %v805
        %v814 = vadd.f32 %v757, %v805
        %v815 = vadd.f32 %v762, %v805
        %v816 = vadd.f32 %v767, %v805
        %v817 = vadd.f32 %v772, %v805
        %v818 = vadd.f32 %v777, %v805
        %v819 = vadd.f32 %v782, %v805
        %v820 = vadd.f32 %v787, %v805
        %v821 = vadd.f32 %v792, %v805
        %v822 = vadd.f32 %v797, %v805
        %v823 = vmax.f32 %v807, 0.0
        %v824 = vmax.f32 %v808, 0.0
        %v825 = vmax.f32 %v809, 0.0
        %v826 = vmax.f32 %v810, 0.0
        %v827 = vmax.f32 %v811, 0.0
        %v828 = vmax.f32 %v812, 0.0
        %v829 = vmax.f32 %v813, 0.0
        %v830 = vmax.f32 %v814, 0.0
        %v831 = vmax.f32 %v815, 0.0
        %v832 = vmax.f32 %v816, 0.0
        %v833 = vmax.f32 %v817, 0.0
        %v834 = vmax.f32 %v818, 0.0
        %v835 = vmax.f32 %v819, 0.0
        %v836 = vmax.f32 %v820, 0.0
        %v837 = vmax.f32 %v821, 0.0
        %v838 = vmax.f32 %v822, 0.0
        %v839 = vld [vmem:[#allocation2] sm:$0xff]
        %v840 = vld [vmem:[#allocation2 + $0x8] sm:$0xff]
        %v841 = vld [vmem:[#allocation2 + $0x10] sm:$0xff]
        %v842 = vld [vmem:[#allocation2 + $0x18] sm:$0xff]
        %v843 = vld [vmem:[#allocation2 + $0x20] sm:$0xff]
        %v844 = vld [vmem:[#allocation2 + $0x28] sm:$0xff]
        %v845 = vld [vmem:[#allocation2 + $0x30] sm:$0xff]
        %v846 = vld [vmem:[#allocation2 + $0x38] sm:$0xff]
        %v847 = vld [vmem:[#allocation2 + $0x40] sm:$0xff]
        %v848 = vld [vmem:[#allocation2 + $0x48] sm:$0xff]
        %v849 = vld [vmem:[#allocation2 + $0x50] sm:$0xff]
        %v850 = vld [vmem:[#allocation2 + $0x58] sm:$0xff]
        %v851 = vld [vmem:[#allocation2 + $0x60] sm:$0xff]
        %v852 = vld [vmem:[#allocation2 + $0x68] sm:$0xff]
        %v853 = vld [vmem:[#allocation2 + $0x70] sm:$0xff]
        %v854 = vld [vmem:[#allocation2 + $0x78] sm:$0xff]
        %v855 = vld [vmem:[%s5] sm:$0x1]
        %v857 = vlaneseq
        %v858 = vshrl.u32 %v857, 7
        %v859 = vsub.s32 0, %v858
        %v860 = vrot.slane %v855, %v859
        %862 = vmatprep.subr.mxu0 0.0
        %863 = vmatpush1.msra.mxu0 %v839
        %864 = vmatprep.subr.mxu0 0.0
        %865 = vmatpush1.msra.mxu0 %v840
        %866 = vmatprep.subr.mxu0 0.0
        %867 = vmatpush1.msra.mxu0 %v841
        %868 = vmatprep.subr.mxu0 0.0
        %869 = vmatpush1.msra.mxu0 %v842
        %870 = vmatprep.subr.mxu0 0.0
        %871 = vmatpush1.msra.mxu0 %v843
        %872 = vmatprep.subr.mxu0 0.0
        %873 = vmatpush1.msra.mxu0 %v844
        %874 = vmatprep.subr.mxu0 0.0
        %875 = vmatpush1.msra.mxu0 %v845
        %876 = vmatprep.subr.mxu0 0.0
        %877 = vmatpush1.msra.mxu0 %v846
        %878 = vmatprep.subr.mxu0 0.0
        %879 = vmatpush1.msra.mxu0 %v847
        %880 = vmatprep.subr.mxu0 0.0
        %881 = vmatpush1.msra.mxu0 %v848
        %882 = vmatprep.subr.mxu0 0.0
        %883 = vmatpush1.msra.mxu0 %v849
        %884 = vmatprep.subr.mxu0 0.0
        %885 = vmatpush1.msra.mxu0 %v850
        %886 = vmatprep.subr.mxu0 0.0
        %887 = vmatpush1.msra.mxu0 %v851
        %888 = vmatprep.subr.mxu0 0.0
        %889 = vmatpush1.msra.mxu0 %v852
        %890 = vmatprep.subr.mxu0 0.0
        %891 = vmatpush1.msra.mxu0 %v853
        %892 = vmatprep.subr.mxu0 0.0
        %893 = vmatpush1.msra.mxu0 %v854
        %894 = vmatprep.subr.mxu0 0.0
        %895 = vmatpush1.msra.mxu0 0.0
        %896 = vmatprep.subr.mxu0 0.0
        %897 = vmatpush1.msra.mxu0 0.0
        %898 = vmatprep.subr.mxu0 0.0
        %899 = vmatpush1.msra.mxu0 0.0
        %900 = vmatprep.subr.mxu0 0.0
        %901 = vmatpush1.msra.mxu0 0.0
        %902 = vmatprep.subr.mxu0 0.0
        %903 = vmatpush1.msra.mxu0 0.0
        %904 = vmatprep.subr.mxu0 0.0
        %905 = vmatpush1.msra.mxu0 0.0
        %906 = vmatprep.subr.mxu0 0.0
        %907 = vmatpush1.msra.mxu0 0.0
        %908 = vmatprep.subr.mxu0 0.0
        %909 = vmatpush1.msra.mxu0 0.0
        %910 = vmatprep.subr.mxu0 0.0
        %911 = vmatpush1.msra.mxu0 0.0
        %912 = vmatprep.subr.mxu0 0.0
        %913 = vmatpush1.msra.mxu0 0.0
        %914 = vmatprep.subr.mxu0 0.0
        %915 = vmatpush1.msra.mxu0 0.0
        %916 = vmatprep.subr.mxu0 0.0
        %917 = vmatpush1.msra.mxu0 0.0
        %918 = vmatprep.subr.mxu0 0.0
        %919 = vmatpush1.msra.mxu0 0.0
        %920 = vmatprep.subr.mxu0 0.0
        %921 = vmatpush1.msra.mxu0 0.0
        %922 = vmatprep.subr.mxu0 0.0
        %923 = vmatpush1.msra.mxu0 0.0
        %924 = vmatprep.subr.mxu0 0.0
        %925 = vmatpush1.msra.mxu0 0.0
        %926 = vmatprep.mubr.f32.mxu0 0.0
        %927 = vmatmul.mubr.f32.gmra.mrb[0].mxu0 %v823
        %v928 = vpop.f32.mrb[0].mxu0
        %v929 = vadd.f32 %v860, %v928
        %v930 = vpop.f32.mrb[0].mxu0
        %931 = vmatprep.mubr.f32.mxu0 0.0
        %932 = vmatmul.mubr.f32.gmra.mrb[0].mxu0 %v824
        %v933 = vpop.f32.mrb[0].mxu0
        %v934 = vadd.f32 %v860, %v933
        %v935 = vpop.f32.mrb[0].mxu0
        %936 = vmatprep.mubr.f32.mxu0 0.0
        %937 = vmatmul.mubr.f32.gmra.mrb[0].mxu0 %v825
        %v938 = vpop.f32.mrb[0].mxu0
        %v939 = vadd.f32 %v860, %v938
        %v940 = vpop.f32.mrb[0].mxu0
        %941 = vmatprep.mubr.f32.mxu0 0.0
        %942 = vmatmul.mubr.f32.gmra.mrb[0].mxu0 %v826
        %v943 = vpop.f32.mrb[0].mxu0
        %v944 = vadd.f32 %v860, %v943
        %v945 = vpop.f32.mrb[0].mxu0
        %946 = vmatprep.mubr.f32.mxu0 0.0
        %947 = vmatmul.mubr.f32.gmra.mrb[0].mxu0 %v827
        %v948 = vpop.f32.mrb[0].mxu0
        %v949 = vadd.f32 %v860, %v948
        %v950 = vpop.f32.mrb[0].mxu0
        %951 = vmatprep.mubr.f32.mxu0 0.0
        %952 = vmatmul.mubr.f32.gmra.mrb[0].mxu0 %v828
        %v953 = vpop.f32.mrb[0].mxu0
        %v954 = vadd.f32 %v860, %v953
        %v955 = vpop.f32.mrb[0].mxu0
        %956 = vmatprep.mubr.f32.mxu0 0.0
        %957 = vmatmul.mubr.f32.gmra.mrb[0].mxu0 %v829
        %v958 = vpop.f32.mrb[0].mxu0
        %v959 = vadd.f32 %v860, %v958
        %v960 = vpop.f32.mrb[0].mxu0
        %961 = vmatprep.mubr.f32.mxu0 0.0
        %962 = vmatmul.mubr.f32.gmra.mrb[0].mxu0 %v830
        %v963 = vpop.f32.mrb[0].mxu0
        %v964 = vadd.f32 %v860, %v963
        %v965 = vpop.f32.mrb[0].mxu0
        %966 = vmatprep.mubr.f32.mxu0 0.0
        %967 = vmatmul.mubr.f32.gmra.mrb[0].mxu0 %v831
        %v968 = vpop.f32.mrb[0].mxu0
        %v969 = vadd.f32 %v860, %v968
        %v970 = vpop.f32.mrb[0].mxu0
        %971 = vmatprep.mubr.f32.mxu0 0.0
        %972 = vmatmul.mubr.f32.gmra.mrb[0].mxu0 %v832
        %v973 = vpop.f32.mrb[0].mxu0
        %v974 = vadd.f32 %v860, %v973
        %v975 = vpop.f32.mrb[0].mxu0
        %976 = vmatprep.mubr.f32.mxu0 0.0
        %977 = vmatmul.mubr.f32.gmra.mrb[0].mxu0 %v833
        %v978 = vpop.f32.mrb[0].mxu0
        %v979 = vadd.f32 %v860, %v978
        %v980 = vpop.f32.mrb[0].mxu0
        %981 = vmatprep.mubr.f32.mxu0 0.0
        %982 = vmatmul.mubr.f32.gmra.mrb[0].mxu0 %v834
        %v983 = vpop.f32.mrb[0].mxu0
        %v984 = vadd.f32 %v860, %v983
        %v985 = vpop.f32.mrb[0].mxu0
        %986 = vmatprep.mubr.f32.mxu0 0.0
        %987 = vmatmul.mubr.f32.gmra.mrb[0].mxu0 %v835
        %v988 = vpop.f32.mrb[0].mxu0
        %v989 = vadd.f32 %v860, %v988
        %v990 = vpop.f32.mrb[0].mxu0
        %991 = vmatprep.mubr.f32.mxu0 0.0
        %992 = vmatmul.mubr.f32.gmra.mrb[0].mxu0 %v836
        %v993 = vpop.f32.mrb[0].mxu0
        %v994 = vadd.f32 %v860, %v993
        %v995 = vpop.f32.mrb[0].mxu0
        %996 = vmatprep.mubr.f32.mxu0 0.0
        %997 = vmatmul.mubr.f32.gmra.mrb[0].mxu0 %v837
        %v998 = vpop.f32.mrb[0].mxu0
        %v999 = vadd.f32 %v860, %v998
        %v1000 = vpop.f32.mrb[0].mxu0
        %1001 = vmatprep.mubr.f32.mxu0 0.0
        %1002 = vmatmul.mubr.f32.gmra.mrb[0].mxu0 %v838
        %v1003 = vpop.f32.mrb[0].mxu0
        %v1004 = vadd.f32 %v860, %v1003
        %v1005 = vpop.f32.mrb[0].mxu0
        %1006 = vdwg.mxu0
        %1007 = vmax.xlane.f32.xlu0 %v929
        %v1008 = vpop.xlane.xlu0 %1007
        %1009 = vmax.xlane.f32.xlu0 %v934
        %v1010 = vpop.xlane.xlu0 %1009
        %1011 = vmax.xlane.f32.xlu0 %v939
        %v1012 = vpop.xlane.xlu0 %1011
        %1013 = vmax.xlane.f32.xlu0 %v944
        %v1014 = vpop.xlane.xlu0 %1013
        %1015 = vmax.xlane.f32.xlu0 %v949
        %v1016 = vpop.xlane.xlu0 %1015
        %1017 = vmax.xlane.f32.xlu0 %v954
        %v1018 = vpop.xlane.xlu0 %1017
        %1019 = vmax.xlane.f32.xlu0 %v959
        %v1020 = vpop.xlane.xlu0 %1019
        %1021 = vmax.xlane.f32.xlu0 %v964
        %v1022 = vpop.xlane.xlu0 %1021
        %1023 = vmax.xlane.f32.xlu0 %v969
        %v1024 = vpop.xlane.xlu0 %1023
        %1025 = vmax.xlane.f32.xlu0 %v974
        %v1026 = vpop.xlane.xlu0 %1025
        %1027 = vmax.xlane.f32.xlu0 %v979
        %v1028 = vpop.xlane.xlu0 %1027
        %1029 = vmax.xlane.f32.xlu0 %v984
        %v1030 = vpop.xlane.xlu0 %1029
        %1031 = vmax.xlane.f32.xlu0 %v989
        %v1032 = vpop.xlane.xlu0 %1031
        %1033 = vmax.xlane.f32.xlu0 %v994
        %v1034 = vpop.xlane.xlu0 %1033
        %1035 = vmax.xlane.f32.xlu0 %v999
        %v1036 = vpop.xlane.xlu0 %1035
        %1037 = vmax.xlane.f32.xlu0 %v1004
        %v1038 = vpop.xlane.xlu0 %1037
        %v1039 = vsub.f32 %v929, %v1008
        %v1040 = vsub.f32 %v934, %v1010
        %v1041 = vsub.f32 %v939, %v1012
        %v1042 = vsub.f32 %v944, %v1014
        %v1043 = vsub.f32 %v949, %v1016
        %v1044 = vsub.f32 %v954, %v1018
        %v1045 = vsub.f32 %v959, %v1020
        %v1046 = vsub.f32 %v964, %v1022
        %v1047 = vsub.f32 %v969, %v1024
        %v1048 = vsub.f32 %v974, %v1026
        %v1049 = vsub.f32 %v979, %v1028
        %v1050 = vsub.f32 %v984, %v1030
        %v1051 = vsub.f32 %v989, %v1032
        %v1052 = vsub.f32 %v994, %v1034
        %v1053 = vsub.f32 %v999, %v1036
        %v1054 = vsub.f32 %v1004, %v1038
        %v1055 = vmul.f32 %v1039, 1.442695
        %v1056 = vpow.pop %v1055
        %v1057 = vmul.f32 %v1040, 1.442695
        %v1058 = vpow.pop %v1057
        %v1059 = vmul.f32 %v1041, 1.442695
        %v1060 = vpow.pop %v1059
        %v1061 = vmul.f32 %v1042, 1.442695
        %v1062 = vpow.pop %v1061
        %v1063 = vmul.f32 %v1043, 1.442695
        %v1064 = vpow.pop %v1063
        %v1065 = vmul.f32 %v1044, 1.442695
        %v1066 = vpow.pop %v1065
        %v1067 = vmul.f32 %v1045, 1.442695
        %v1068 = vpow.pop %v1067
        %v1069 = vmul.f32 %v1046, 1.442695
        %v1070 = vpow.pop %v1069
        %v1071 = vmul.f32 %v1047, 1.442695
        %v1072 = vpow.pop %v1071
        %v1073 = vmul.f32 %v1048, 1.442695
        %v1074 = vpow.pop %v1073
        %v1075 = vmul.f32 %v1049, 1.442695
        %v1076 = vpow.pop %v1075
        %v1077 = vmul.f32 %v1050, 1.442695
        %v1078 = vpow.pop %v1077
        %v1079 = vmul.f32 %v1051, 1.442695
        %v1080 = vpow.pop %v1079
        %v1081 = vmul.f32 %v1052, 1.442695
        %v1082 = vpow.pop %v1081
        %v1083 = vmul.f32 %v1053, 1.442695
        %v1084 = vpow.pop %v1083
        %v1085 = vmul.f32 %v1054, 1.442695
        %v1086 = vpow.pop %v1085
        %1087 = vadd.xlane.f32.xlu0 %v1056
        %v1088 = vpop.xlane.xlu0 %1087
        %1089 = vadd.xlane.f32.xlu0 %v1058
        %v1090 = vpop.xlane.xlu0 %1089
        %1091 = vadd.xlane.f32.xlu0 %v1060
        %v1092 = vpop.xlane.xlu0 %1091
        %1093 = vadd.xlane.f32.xlu0 %v1062
        %v1094 = vpop.xlane.xlu0 %1093
        %1095 = vadd.xlane.f32.xlu0 %v1064
        %v1096 = vpop.xlane.xlu0 %1095
        %1097 = vadd.xlane.f32.xlu0 %v1066
        %v1098 = vpop.xlane.xlu0 %1097
        %1099 = vadd.xlane.f32.xlu0 %v1068
        %v1100 = vpop.xlane.xlu0 %1099
        %1101 = vadd.xlane.f32.xlu0 %v1070
        %v1102 = vpop.xlane.xlu0 %1101
        %1103 = vadd.xlane.f32.xlu0 %v1072
        %v1104 = vpop.xlane.xlu0 %1103
        %1105 = vadd.xlane.f32.xlu0 %v1074
        %v1106 = vpop.xlane.xlu0 %1105
        %1107 = vadd.xlane.f32.xlu0 %v1076
        %v1108 = vpop.xlane.xlu0 %1107
        %1109 = vadd.xlane.f32.xlu0 %v1078
        %v1110 = vpop.xlane.xlu0 %1109
        %1111 = vadd.xlane.f32.xlu0 %v1080
        %v1112 = vpop.xlane.xlu0 %1111
        %1113 = vadd.xlane.f32.xlu0 %v1082
        %v1114 = vpop.xlane.xlu0 %1113
        %1115 = vadd.xlane.f32.xlu0 %v1084
        %v1116 = vpop.xlane.xlu0 %1115
        %1117 = vadd.xlane.f32.xlu0 %v1086
        %v1118 = vpop.xlane.xlu0 %1117
        %v1119 = vlog2.pop %v1088
        %v1120 = vmul.f32 %v1119, 0.6931472
        %v1121 = vlog2.pop %v1090
        %v1122 = vmul.f32 %v1121, 0.6931472
        %v1123 = vlog2.pop %v1092
        %v1124 = vmul.f32 %v1123, 0.6931472
        %v1125 = vlog2.pop %v1094
        %v1126 = vmul.f32 %v1125, 0.6931472
        %v1127 = vlog2.pop %v1096
        %v1128 = vmul.f32 %v1127, 0.6931472
        %v1129 = vlog2.pop %v1098
        %v1130 = vmul.f32 %v1129, 0.6931472
        %v1131 = vlog2.pop %v1100
        %v1132 = vmul.f32 %v1131, 0.6931472
        %v1133 = vlog2.pop %v1102
        %v1134 = vmul.f32 %v1133, 0.6931472
        %v1135 = vlog2.pop %v1104
        %v1136 = vmul.f32 %v1135, 0.6931472
        %v1137 = vlog2.pop %v1106
        %v1138 = vmul.f32 %v1137, 0.6931472
        %v1139 = vlog2.pop %v1108
        %v1140 = vmul.f32 %v1139, 0.6931472
        %v1141 = vlog2.pop %v1110
        %v1142 = vmul.f32 %v1141, 0.6931472
        %v1143 = vlog2.pop %v1112
        %v1144 = vmul.f32 %v1143, 0.6931472
        %v1145 = vlog2.pop %v1114
        %v1146 = vmul.f32 %v1145, 0.6931472
        %v1147 = vlog2.pop %v1116
        %v1148 = vmul.f32 %v1147, 0.6931472
        %v1149 = vlog2.pop %v1118
        %v1150 = vmul.f32 %v1149, 0.6931472
        %v1151 = vadd.f32 %v1008, %v1120
        %v1152 = vadd.f32 %v1010, %v1122
        %v1153 = vadd.f32 %v1012, %v1124
        %v1154 = vadd.f32 %v1014, %v1126
        %v1155 = vadd.f32 %v1016, %v1128
        %v1156 = vadd.f32 %v1018, %v1130
        %v1157 = vadd.f32 %v1020, %v1132
        %v1158 = vadd.f32 %v1022, %v1134
        %v1159 = vadd.f32 %v1024, %v1136
        %v1160 = vadd.f32 %v1026, %v1138
        %v1161 = vadd.f32 %v1028, %v1140
        %v1162 = vadd.f32 %v1030, %v1142
        %v1163 = vadd.f32 %v1032, %v1144
        %v1164 = vadd.f32 %v1034, %v1146
        %v1165 = vadd.f32 %v1036, %v1148
        %v1166 = vadd.f32 %v1038, %v1150
        %v1167 = vsub.f32 %v929, %v1151
        %v1168 = vsub.f32 %v934, %v1152
        %v1169 = vsub.f32 %v939, %v1153
        %v1170 = vsub.f32 %v944, %v1154
        %v1171 = vsub.f32 %v949, %v1155
        %v1172 = vsub.f32 %v954, %v1156
        %v1173 = vsub.f32 %v959, %v1157
        %v1174 = vsub.f32 %v964, %v1158
        %v1175 = vsub.f32 %v969, %v1159
        %v1176 = vsub.f32 %v974, %v1160
        %v1177 = vsub.f32 %v979, %v1161
        %v1178 = vsub.f32 %v984, %v1162
        %v1179 = vsub.f32 %v989, %v1163
        %v1180 = vsub.f32 %v994, %v1164
        %v1181 = vsub.f32 %v999, %v1165
        %v1182 = vsub.f32 %v1004, %v1166
        %1183 = vst [vmem:[%s260] sm:$0xff] %v1167
        %1184 = vst [vmem:[%s260 + $0x8] sm:$0xff] %v1168
        %1185 = vst [vmem:[%s260 + $0x10] sm:$0xff] %v1169
        %1186 = vst [vmem:[%s260 + $0x18] sm:$0xff] %v1170
        %1187 = vst [vmem:[%s260 + $0x20] sm:$0xff] %v1171
        %1188 = vst [vmem:[%s260 + $0x28] sm:$0xff] %v1172
        %1189 = vst [vmem:[%s260 + $0x30] sm:$0xff] %v1173
        %1190 = vst [vmem:[%s260 + $0x38] sm:$0xff] %v1174
        %1191 = vst [vmem:[%s260 + $0x40] sm:$0xff] %v1175
        %1192 = vst [vmem:[%s260 + $0x48] sm:$0xff] %v1176
        %1193 = vst [vmem:[%s260 + $0x50] sm:$0xff] %v1177
        %1194 = vst [vmem:[%s260 + $0x58] sm:$0xff] %v1178
        %1195 = vst [vmem:[%s260 + $0x60] sm:$0xff] %v1179
        %1196 = vst [vmem:[%s260 + $0x68] sm:$0xff] %v1180
        %1197 = vst [vmem:[%s260 + $0x70] sm:$0xff] %v1181
        %1198 = vst [vmem:[%s260 + $0x78] sm:$0xff] %v1182
        %s1199 = sand.u32 %s160, 1
        %s1200 = scalar_lea.sflag [#allocation4], %s1199
        %s1201 = sand.u32 %s160, 1
        %s1202 = smul.addr %s1201, 128
        %s1203 = scalar_lea.vmem [#allocation5], %s1202
        // Predicated region
        $region49: #{tpu_custom_call.1} parent=43 // pred_check
          %p1204 = pneg %p170
        $region50: #{tpu_custom_call.1} parent=43 // pred_check_branch
          %1206 = sbr.rel (%p1204) target = $region52
        $region51: #{tpu_custom_call.1} parent=43 // pred_region
          %s1207 = smul.u32 16, %s21
          %s1209 = ssub.s32 2048, 2048
          %1210 = vsyncadd %s1200, %s1209
          %s1211 = smul.addr %s1207, 128
          %s1212 = scalar_lea.hbm %s6, %s1211
          %s1213 = sshll.u32 %s1203, 4
          %s1214 = int_to_ptr.vmem [resolvable:$true] %s1213
          %1219 = dma.vmem_to_hbm [thread:$0]  %s1214, 2048, %s1212, %s1200, 128, 128, 8
        $region52: #{tpu_custom_call.1} parent=43 // pred_fallthru
          _
      $region44: #{tpu_custom_call.1} parent=5 // pred_fallthru
        _
      %p1220 = scmp.le.s32.totalorder 2, %s16
      // Predicated region
      $region53: #{tpu_custom_call.1} parent=5 // pred_check
        %p1221 = pneg %p1220
      $region54: #{tpu_custom_call.1} parent=5 // pred_check_branch
        %1223 = sbr.rel (%p1221) target = $region56
      $region55: #{tpu_custom_call.1} parent=5 // pred_region
        %s1224 = ssub.s32 %s16, 2
        // Predicated region
        $region57: #{tpu_custom_call.1} parent=55 // pred_check
          %p1225 = pneg %p176
        $region58: #{tpu_custom_call.1} parent=55 // pred_check_branch
          %1227 = sbr.rel (%p1225) target = $region60
        $region59: #{tpu_custom_call.1} parent=55 // pred_region
          %s1228 = sand.u32 %s161, 1
          %s1229 = scalar_lea.sflag [#allocation4], %s1228
          %s1230 = sand.u32 %s161, 1
          %s1231 = smul.addr %s1230, 128
          %s1232 = scalar_lea.vmem [#allocation5], %s1231
          %1233 = dma.done %s1229, 2048
        $region60: #{tpu_custom_call.1} parent=55 // pred_fallthru
          _
      $region56: #{tpu_custom_call.1} parent=5 // pred_fallthru
        _
    $region6: #{tpu_custom_call.1} parent=1 // loop_footer
      %s20 = sadd.s32 1, %s16
    $region7: #{tpu_custom_call.1} parent=1 // loop_footer_branch
      %15 = sbr.rel target = $region3
    $region8: #{tpu_custom_call.1} parent=1 // loop_exit
      _
    %1234 = vsyncpa [#allocation3], 1
    %s1235 = scalar_lea.sflag [#allocation3], 1
    %1236 = vsyncpa %s1235, 1
    %1237 = vsyncpa [#allocation4], 1
    %s1238 = scalar_lea.sflag [#allocation4], 1
    %1239 = vsyncpa %s1238, 1

</llo_original>
